<compile_context>
chip_gen: v5e
topology: v5e:2x2
jax: 0.10.0
libtpu: 0.0.40
codegen_flags: <defaults>
</compile_context>

<pallas_src>
import jax
import jax.numpy as jnp
from jax.experimental import pallas as pl
from jax.experimental.pallas import tpu as pltpu

DIM1 = 32
DIM2 = 32
BN_EPS = 1e-5
LANES = 128


def _round_up(x, m):
    return ((x + m - 1) // m) * m


# ---------------------------------------------------------------------------
# Fused single-call kernel (small graphs): conv1 -> BN -> conv2 entirely in
# VMEM, one kernel launch, no intermediate HBM traffic.
# ---------------------------------------------------------------------------
def _gin_fused_kernel(adj_ref, x_ref, w1a_ref, b1a_ref, w1b_ref, b1b_ref,
                      gamma_ref, beta_ref, w2a_ref, b2a_ref, w2b_ref, b2b_ref,
                      out_ref):
    adj = adj_ref[...]                                   # (N, N) bf16
    x = x_ref[...]                                       # (N, F) f32

    # conv1: nn1((1+eps)*x_i + sum_j x_j), eps = 0.  bf16 MXU operands for the
    # N x N aggregation, f32 accumulation; self-loop term added in f32.
    agg = jnp.dot(adj, x.astype(jnp.bfloat16),
                  preferred_element_type=jnp.float32) + x
    h = jnp.dot(agg, w1a_ref[...], preferred_element_type=jnp.float32) + b1a_ref[...]
    h = jnp.maximum(h, 0.0)                              # ReLU inside nn1
    h = jnp.dot(h, w1b_ref[...], preferred_element_type=jnp.float32) + b1b_ref[...]
    h = jnp.maximum(h, 0.0)                              # F.relu(conv1(...))

    # BatchNorm1d, training mode (batch mean, biased variance), true node count.
    inv_n = 1.0 / h.shape[0]
    mean = jnp.sum(h, axis=0, keepdims=True) * inv_n
    ex2 = jnp.sum(h * h, axis=0, keepdims=True) * inv_n
    var = ex2 - mean * mean
    scale = gamma_ref[...] * jax.lax.rsqrt(var + BN_EPS)
    shift = beta_ref[...] - mean * scale
    h_bn = h * scale + shift

    # conv2: nn2((1+eps)*h_i + sum_j h_j).
    agg2 = jnp.dot(adj, h_bn.astype(jnp.bfloat16),
                   preferred_element_type=jnp.float32) + h_bn
    h2 = jnp.dot(agg2, w2a_ref[...], preferred_element_type=jnp.float32) + b2a_ref[...]
    h2 = jnp.maximum(h2, 0.0)                            # ReLU inside nn2
    out = jnp.dot(h2, w2b_ref[...], preferred_element_type=jnp.float32) + b2b_ref[...]
    out_ref[...] = out.astype(out_ref.dtype)             # lane-dense (N, 128)


# ---------------------------------------------------------------------------
# Tiled GINConv kernel (large graphs): K-tiled aggregation with an f32 VMEM
# accumulator, MLP + store only on the final K step (P3 accumulator pattern).
# ---------------------------------------------------------------------------
def _make_conv_kernel(n, tk, out_relu):
    rem = n % tk        # nonzero iff the final K block is partial (Python int)

    def kernel(adj_ref, zfull_ref, zrow_ref, wa_ref, ba_ref, wb_ref, bb_ref,
               out_ref, acc_ref):
        k = pl.program_id(1)

        @pl.when(k == 0)
        def _():
            acc_ref[...] = jnp.zeros_like(acc_ref)

        a = adj_ref[...]                                 # (TM, TK) bf16
        z = zfull_ref[...]                               # (TK, D)  bf16
        if rem:
            # The final K block reads past the arrays; OOB VMEM contents are
            # undefined, so zero BOTH operands' invalid span (0 * 0 == 0, so
            # no NaN/Inf can leak into valid output rows).
            col = k * tk + jax.lax.broadcasted_iota(jnp.int32, (1, tk), 1)
            a = jnp.where(col < n, a, 0.0)
            row = k * tk + jax.lax.broadcasted_iota(jnp.int32, (tk, 1), 0)
            z = jnp.where(row < n, z, 0.0)
        acc_ref[...] += jnp.dot(a, z, preferred_element_type=jnp.float32)

        @pl.when(k == pl.num_programs(1) - 1)
        def _():
            agg = acc_ref[...] + zrow_ref[...]           # self-loop (1+eps)*z_i, eps=0
            h = jnp.dot(agg, wa_ref[...], preferred_element_type=jnp.float32) + ba_ref[...]
            h = jnp.maximum(h, 0.0)                      # ReLU inside the MLP
            o = jnp.dot(h, wb_ref[...], preferred_element_type=jnp.float32) + bb_ref[...]
            if out_relu:
                o = jnp.maximum(o, 0.0)
            out_ref[...] = o.astype(out_ref.dtype)

    return kernel


def _tiled_gin_conv(adj_bf, z_bf, z_f32, wa, ba, wb, bb, *, out_relu, tm, tk,
                    cparams):
    """out = [relu] MLP(adj @ z + z)  with adj row-tiled (tm) and K-tiled (tk)."""
    n = adj_bf.shape[0]
    d_in = z_bf.shape[1]
    d_out = bb.shape[1]
    nt = pl.cdiv(n, tm)
    nk = pl.cdiv(n, tk)
    kernel = _make_conv_kernel(n, tk, out_relu)
    return pl.pallas_call(
        kernel,
        out_shape=jax.ShapeDtypeStruct((n, d_out), jnp.float32),
        grid=(nt, nk),
        in_specs=[
            pl.BlockSpec((tm, tk), lambda i, k: (i, k)),       # adjacency tile (bf16)
            pl.BlockSpec((tk, d_in), lambda i, k: (k, 0)),     # contraction operand (bf16)
            pl.BlockSpec((tm, d_in), lambda i, k: (i, 0)),     # self-loop row tile (f32)
            pl.BlockSpec((d_in, wa.shape[1]), lambda i, k: (0, 0)),   # wa
            pl.BlockSpec((1, ba.shape[1]), lambda i, k: (0, 0)),      # ba
            pl.BlockSpec((wb.shape[0], d_out), lambda i, k: (0, 0)),  # wb
            pl.BlockSpec((1, d_out), lambda i, k: (0, 0)),            # bb
        ],
        out_specs=pl.BlockSpec((tm, d_out), lambda i, k: (i, 0)),
        scratch_shapes=[pltpu.VMEM((tm, d_in), jnp.float32)],
        compiler_params=cparams,
    )(adj_bf, z_bf, z_f32, wa, ba, wb, bb)


def gin_net_forward(x, adj, params, *, max_fused_nodes=512, row_tile=512,
                    k_tile=2048):
    """x: [N, num_features] f32; adj: [N, N] dense adjacency, adj[i, j] = #edges j->i.

    Pass `adj` pre-cast to bf16 (edge counts are exact in bf16) so the N^2 cast
    is done once per graph, not per forward; f32 adjacencies are cast here as a
    fallback.
    """
    n, f = x.shape
    num_classes = params["w2b"].shape[1]
    out_pad = _round_up(num_classes, LANES)

    adj_bf = adj if adj.dtype == jnp.bfloat16 else adj.astype(jnp.bfloat16)

    # Zero-pad the final linear to a lane-dense 128-wide output (sliced below).
    w2b = jnp.zeros((DIM2, out_pad), jnp.float32).at[:, :num_classes].set(params["w2b"])
    b2b = jnp.zeros((1, out_pad), jnp.float32).at[:, :num_classes].set(params["b2b"])

    # ---- Small graphs: one fused kernel, no intermediate HBM round trip. ----
    if n <= max_fused_nodes:
        cparams = pltpu.CompilerParams(
            dimension_semantics=("arbitrary",),
            vmem_limit_bytes=48 * 1024 * 1024)
        full = lambda shape: pl.BlockSpec(shape, lambda i: (0, 0))
        out_padded = pl.pallas_call(
            _gin_fused_kernel,
            out_shape=jax.ShapeDtypeStruct((n, out_pad), jnp.float32),
            grid=(1,),
            in_specs=[
                full((n, n)), full((n, f)),
                full((f, DIM1)), full((1, DIM1)), full((DIM1, DIM1)), full((1, DIM1)),
                full((1, DIM1)), full((1, DIM1)),
                full((DIM1, DIM2)), full((1, DIM2)),
                full((DIM2, out_pad)), full((1, out_pad)),
            ],
            out_specs=full((n, out_pad)),
            compiler_params=cparams,
        )(adj_bf, x, params["w1a"], params["b1a"], params["w1b"], params["b1b"],
          params["gamma"], params["beta"], params["w2a"], params["b2a"], w2b, b2b)
        return out_padded[:, :num_classes]

    # ---- Large graphs: K-tiled, row-parallel passes (VMEM independent of N).
    tm = row_tile                         # n > max_fused_nodes >= row_tile  =>  nt >= 2
    tk = n if n <= k_tile else k_tile     # lane dim: multiple of 128 or full extent
    cparams = pltpu.CompilerParams(
        dimension_semantics=("parallel", "arbitrary"),
        vmem_limit_bytes=48 * 1024 * 1024)

    x_bf = x.astype(jnp.bfloat16)
    # TODO(synk): when num_features >= DIM1, commute w1a through the aggregation
    # (precompute x @ w1a) to shrink the streamed contraction operand to 32 lanes.
    h_pre = _tiled_gin_conv(
        adj_bf, x_bf, x,
        params["w1a"], params["b1a"], params["w1b"], params["b1b"],
        out_relu=True, tm=tm, tk=tk, cparams=cparams)

    # BatchNorm1d hoisted out of the per-tile loop: one tiny (N, 32) reduce,
    # training-mode statistics (biased variance) over the true node count.
    mean = jnp.mean(h_pre, axis=0, keepdims=True)
    var = jnp.mean(h_pre * h_pre, axis=0, keepdims=True) - mean * mean
    scale = params["gamma"] * jax.lax.rsqrt(var + BN_EPS)
    shift = params["beta"] - mean * scale
    h_bn = h_pre * scale + shift
    h_bn_bf = h_bn.astype(jnp.bfloat16)

    out_padded = _tiled_gin_conv(
        adj_bf, h_bn_bf, h_bn,
        params["w2a"], params["b2a"], w2b, b2b,
        out_relu=False, tm=tm, tk=tk, cparams=cparams)
    return out_padded[:, :num_classes]


def _linear_init(key, fan_in, fan_out):
    # PyTorch nn.Linear default init: U(-1/sqrt(fan_in), 1/sqrt(fan_in)).
    kw, kb = jax.random.split(key)
    bound = 1.0 / jnp.sqrt(float(fan_in))
    w = jax.random.uniform(kw, (fan_in, fan_out), jnp.float32, -bound, bound)
    b = jax.random.uniform(kb, (1, fan_out), jnp.float32, -bound, bound)
    return w, b


def init_params(key, num_features, num_classes):
    k1, k2, k3, k4 = jax.random.split(key, 4)
    w1a, b1a = _linear_init(k1, num_features, DIM1)
    w1b, b1b = _linear_init(k2, DIM1, DIM1)
    w2a, b2a = _linear_init(k3, DIM1, DIM2)
    w2b, b2b = _linear_init(k4, DIM2, num_classes)
    return dict(
        w1a=w1a, b1a=b1a, w1b=w1b, b1b=b1b,
        gamma=jnp.ones((1, DIM1), jnp.float32),
        beta=jnp.zeros((1, DIM1), jnp.float32),
        w2a=w2a, b2a=b2a, w2b=w2b, b2b=b2b,
    )


def edge_index_to_dense_adj(edge_index, num_nodes, dtype=jnp.bfloat16):
    """A[dst, src] = #edges src->dst.  Built (and cast to bf16) once per graph:
    small integer edge multiplicities are exact in bf16 and this halves the
    kernel's adjacency HBM traffic."""
    src, dst = edge_index[0], edge_index[1]
    adj = jnp.zeros((num_nodes, num_nodes), jnp.float32)
    adj = adj.at[dst, src].add(1.0)       # message flows src -> dst, aggregated at dst
    return adj.astype(dtype)


if __name__ == "__main__":
    num_nodes = 16
    num_features = 8
    num_classes = 4

    key = jax.random.PRNGKey(0)
    kx, kp = jax.random.split(key)

    # Node features.
    x = jax.random.normal(kx, (num_nodes, num_features), jnp.float32)

    # Undirected ring graph as edge_index [2, E] (both directions).
    idx = jnp.arange(num_nodes)
    nxt = (idx + 1) % num_nodes
    src = jnp.concatenate([idx, nxt])
    dst = jnp.concatenate([nxt, idx])
    edge_index = jnp.stack([src, dst])            # [2, 32]

    # `batch` is an argument of the torch forward but is never used there.
    batch = jnp.zeros((num_nodes,), jnp.int32)

    adj = edge_index_to_dense_adj(edge_index, num_nodes)   # bf16, built once
    params = init_params(kp, num_features, num_classes)

    out = gin_net_forward(x, adj, params)
    out = jax.block_until_ready(out)
    assert out.shape == (num_nodes, num_classes)
    assert bool(jnp.all(jnp.isfinite(out)))
    print("KERNEL_OK")
</pallas_src>

<mosaic_0001>
module attributes {stable_mosaic.version = 11 : i64} {
  func.func @_gin_fused_kernel(%arg0: i32, %arg1: memref<16x16xbf16, #tpu.memory_space<vmem>>, %arg2: memref<16x8xf32, #tpu.memory_space<vmem>>, %arg3: memref<8x32xf32, #tpu.memory_space<vmem>>, %arg4: memref<1x32xf32, #tpu.memory_space<vmem>>, %arg5: memref<32x32xf32, #tpu.memory_space<vmem>>, %arg6: memref<1x32xf32, #tpu.memory_space<vmem>>, %arg7: memref<1x32xf32, #tpu.memory_space<vmem>>, %arg8: memref<1x32xf32, #tpu.memory_space<vmem>>, %arg9: memref<32x32xf32, #tpu.memory_space<vmem>>, %arg10: memref<1x32xf32, #tpu.memory_space<vmem>>, %arg11: memref<32x128xf32, #tpu.memory_space<vmem>>, %arg12: memref<1x128xf32, #tpu.memory_space<vmem>>, %arg13: memref<16x128xf32, #tpu.memory_space<vmem>>) attributes {dimension_semantics = [#tpu.dimension_semantics<arbitrary>], iteration_bounds = array<i64: 1>, scalar_prefetch = 0 : i64, scratch_operands = 0 : i64, tpu.core_type = #tpu.core_type<tc>, window_params = [{pipeline_mode = #tpu.pipeline_mode<synchronous>, transform_indices = @transform_0, window_bounds = array<i64: 16, 16>}, {pipeline_mode = #tpu.pipeline_mode<synchronous>, transform_indices = @transform_1, window_bounds = array<i64: 16, 8>}, {pipeline_mode = #tpu.pipeline_mode<synchronous>, transform_indices = @transform_2, window_bounds = array<i64: 8, 32>}, {pipeline_mode = #tpu.pipeline_mode<synchronous>, transform_indices = @transform_3, window_bounds = array<i64: 1, 32>}, {pipeline_mode = #tpu.pipeline_mode<synchronous>, transform_indices = @transform_4, window_bounds = array<i64: 32, 32>}, {pipeline_mode = #tpu.pipeline_mode<synchronous>, transform_indices = @transform_5, window_bounds = array<i64: 1, 32>}, {pipeline_mode = #tpu.pipeline_mode<synchronous>, transform_indices = @transform_6, window_bounds = array<i64: 1, 32>}, {pipeline_mode = #tpu.pipeline_mode<synchronous>, transform_indices = @transform_7, window_bounds = array<i64: 1, 32>}, {pipeline_mode = #tpu.pipeline_mode<synchronous>, transform_indices = @transform_8, window_bounds = array<i64: 32, 32>}, {pipeline_mode = #tpu.pipeline_mode<synchronous>, transform_indices = @transform_9, window_bounds = array<i64: 1, 32>}, {pipeline_mode = #tpu.pipeline_mode<synchronous>, transform_indices = @transform_10, window_bounds = array<i64: 32, 128>}, {pipeline_mode = #tpu.pipeline_mode<synchronous>, transform_indices = @transform_11, window_bounds = array<i64: 1, 128>}, {pipeline_mode = #tpu.pipeline_mode<synchronous>, transform_indices = @transform_12, window_bounds = array<i64: 16, 128>}]} {
    %c0 = arith.constant 0 : index
    %c0_0 = arith.constant 0 : index
    %0 = vector.load %arg1[%c0, %c0_0] : memref<16x16xbf16, #tpu.memory_space<vmem>>, vector<16x16xbf16>
    %c0_1 = arith.constant 0 : index
    %c0_2 = arith.constant 0 : index
    %1 = vector.load %arg2[%c0_1, %c0_2] : memref<16x8xf32, #tpu.memory_space<vmem>>, vector<16x8xf32>
    %2 = arith.truncf %1 : vector<16x8xf32> to vector<16x8xbf16>
    %cst = arith.constant dense<0.000000e+00> : vector<16x8xf32>
    %3 = tpu.matmul %0, %2, %cst {dimension_numbers = #tpu.dot_dimension_numbers<[1], [0], [0], [1], [0, 0, 1, 1], [], []>} : vector<16x16xbf16>, vector<16x8xbf16>, vector<16x8xf32> -> vector<16x8xf32>
    %4 = arith.addf %3, %1 : vector<16x8xf32>
    %c0_3 = arith.constant 0 : index
    %c0_4 = arith.constant 0 : index
    %5 = vector.load %arg3[%c0_3, %c0_4] : memref<8x32xf32, #tpu.memory_space<vmem>>, vector<8x32xf32>
    %cst_5 = arith.constant dense<0.000000e+00> : vector<16x32xf32>
    %6 = tpu.matmul %4, %5, %cst_5 {dimension_numbers = #tpu.dot_dimension_numbers<[1], [0], [0], [1], [0, 0, 1, 1], [], []>} : vector<16x8xf32>, vector<8x32xf32>, vector<16x32xf32> -> vector<16x32xf32>
    %c0_6 = arith.constant 0 : index
    %c0_7 = arith.constant 0 : index
    %7 = vector.load %arg4[%c0_6, %c0_7] : memref<1x32xf32, #tpu.memory_space<vmem>>, vector<1x32xf32>
    %8 = vector.broadcast %7 : vector<1x32xf32> to vector<16x32xf32>
    %9 = arith.addf %6, %8 : vector<16x32xf32>
    %cst_8 = arith.constant 0.000000e+00 : f32
    %10 = vector.broadcast %cst_8 : f32 to vector<16x32xf32>
    %11 = arith.maximumf %9, %10 : vector<16x32xf32>
    %c0_9 = arith.constant 0 : index
    %c0_10 = arith.constant 0 : index
    %12 = vector.load %arg5[%c0_9, %c0_10] : memref<32x32xf32, #tpu.memory_space<vmem>>, vector<32x32xf32>
    %cst_11 = arith.constant dense<0.000000e+00> : vector<16x32xf32>
    %13 = tpu.matmul %11, %12, %cst_11 {dimension_numbers = #tpu.dot_dimension_numbers<[1], [0], [0], [1], [0, 0, 1, 1], [], []>} : vector<16x32xf32>, vector<32x32xf32>, vector<16x32xf32> -> vector<16x32xf32>
    %c0_12 = arith.constant 0 : index
    %c0_13 = arith.constant 0 : index
    %14 = vector.load %arg6[%c0_12, %c0_13] : memref<1x32xf32, #tpu.memory_space<vmem>>, vector<1x32xf32>
    %15 = vector.broadcast %14 : vector<1x32xf32> to vector<16x32xf32>
    %16 = arith.addf %13, %15 : vector<16x32xf32>
    %cst_14 = arith.constant 0.000000e+00 : f32
    %17 = vector.broadcast %cst_14 : f32 to vector<16x32xf32>
    %18 = arith.maximumf %16, %17 : vector<16x32xf32>
    %cst_15 = arith.constant dense<0.000000e+00> : vector<32xf32>
    %19 = vector.multi_reduction <add>, %18, %cst_15 [0] : vector<16x32xf32> to vector<32xf32>
    %20 = vector.shape_cast %19 : vector<32xf32> to vector<1x32xf32>
    %cst_16 = arith.constant 6.250000e-02 : f32
    %21 = vector.broadcast %cst_16 : f32 to vector<1x32xf32>
    %22 = arith.mulf %20, %21 : vector<1x32xf32>
    %23 = arith.mulf %18, %18 : vector<16x32xf32>
    %cst_17 = arith.constant dense<0.000000e+00> : vector<32xf32>
    %24 = vector.multi_reduction <add>, %23, %cst_17 [0] : vector<16x32xf32> to vector<32xf32>
    %25 = vector.shape_cast %24 : vector<32xf32> to vector<1x32xf32>
    %cst_18 = arith.constant 6.250000e-02 : f32
    %26 = vector.broadcast %cst_18 : f32 to vector<1x32xf32>
    %27 = arith.mulf %25, %26 : vector<1x32xf32>
    %28 = arith.mulf %22, %22 : vector<1x32xf32>
    %29 = arith.subf %27, %28 : vector<1x32xf32>
    %c0_19 = arith.constant 0 : index
    %c0_20 = arith.constant 0 : index
    %30 = vector.load %arg7[%c0_19, %c0_20] : memref<1x32xf32, #tpu.memory_space<vmem>>, vector<1x32xf32>
    %cst_21 = arith.constant 9.99999974E-6 : f32
    %31 = vector.broadcast %cst_21 : f32 to vector<1x32xf32>
    %32 = arith.addf %29, %31 : vector<1x32xf32>
    %33 = math.rsqrt %32 : vector<1x32xf32>
    %34 = arith.mulf %30, %33 : vector<1x32xf32>
    %c0_22 = arith.constant 0 : index
    %c0_23 = arith.constant 0 : index
    %35 = vector.load %arg8[%c0_22, %c0_23] : memref<1x32xf32, #tpu.memory_space<vmem>>, vector<1x32xf32>
    %36 = arith.mulf %22, %34 : vector<1x32xf32>
    %37 = arith.subf %35, %36 : vector<1x32xf32>
    %38 = vector.broadcast %34 : vector<1x32xf32> to vector<16x32xf32>
    %39 = arith.mulf %18, %38 : vector<16x32xf32>
    %40 = vector.broadcast %37 : vector<1x32xf32> to vector<16x32xf32>
    %41 = arith.addf %39, %40 : vector<16x32xf32>
    %42 = arith.truncf %41 : vector<16x32xf32> to vector<16x32xbf16>
    %cst_24 = arith.constant dense<0.000000e+00> : vector<16x32xf32>
    %43 = tpu.matmul %0, %42, %cst_24 {dimension_numbers = #tpu.dot_dimension_numbers<[1], [0], [0], [1], [0, 0, 1, 1], [], []>} : vector<16x16xbf16>, vector<16x32xbf16>, vector<16x32xf32> -> vector<16x32xf32>
    %44 = arith.addf %43, %41 : vector<16x32xf32>
    %c0_25 = arith.constant 0 : index
    %c0_26 = arith.constant 0 : index
    %45 = vector.load %arg9[%c0_25, %c0_26] : memref<32x32xf32, #tpu.memory_space<vmem>>, vector<32x32xf32>
    %cst_27 = arith.constant dense<0.000000e+00> : vector<16x32xf32>
    %46 = tpu.matmul %44, %45, %cst_27 {dimension_numbers = #tpu.dot_dimension_numbers<[1], [0], [0], [1], [0, 0, 1, 1], [], []>} : vector<16x32xf32>, vector<32x32xf32>, vector<16x32xf32> -> vector<16x32xf32>
    %c0_28 = arith.constant 0 : index
    %c0_29 = arith.constant 0 : index
    %47 = vector.load %arg10[%c0_28, %c0_29] : memref<1x32xf32, #tpu.memory_space<vmem>>, vector<1x32xf32>
    %48 = vector.broadcast %47 : vector<1x32xf32> to vector<16x32xf32>
    %49 = arith.addf %46, %48 : vector<16x32xf32>
    %cst_30 = arith.constant 0.000000e+00 : f32
    %50 = vector.broadcast %cst_30 : f32 to vector<16x32xf32>
    %51 = arith.maximumf %49, %50 : vector<16x32xf32>
    %c0_31 = arith.constant 0 : index
    %c0_32 = arith.constant 0 : index
    %52 = vector.load %arg11[%c0_31, %c0_32] : memref<32x128xf32, #tpu.memory_space<vmem>>, vector<32x128xf32>
    %cst_33 = arith.constant dense<0.000000e+00> : vector<16x128xf32>
    %53 = tpu.matmul %51, %52, %cst_33 {dimension_numbers = #tpu.dot_dimension_numbers<[1], [0], [0], [1], [0, 0, 1, 1], [], []>} : vector<16x32xf32>, vector<32x128xf32>, vector<16x128xf32> -> vector<16x128xf32>
    %c0_34 = arith.constant 0 : index
    %c0_35 = arith.constant 0 : index
    %54 = vector.load %arg12[%c0_34, %c0_35] : memref<1x128xf32, #tpu.memory_space<vmem>>, vector<1x128xf32>
    %55 = vector.broadcast %54 : vector<1x128xf32> to vector<16x128xf32>
    %56 = arith.addf %53, %55 : vector<16x128xf32>
    %c0_36 = arith.constant 0 : index
    %c0_37 = arith.constant 0 : index
    %57 = vector.load %arg13[%c0_36, %c0_37] : memref<16x128xf32, #tpu.memory_space<vmem>>, vector<16x128xf32>
    tpu.vector_store %arg13[%c0_36, %c0_37], %56 {strides = array<i32>} : memref<16x128xf32, #tpu.memory_space<vmem>>, vector<16x128xf32>,
    return
  }
  func.func @transform_0(%arg0: i32) -> (i32, i32) {
    %c0_i32 = arith.constant 0 : i32
    %c0_i32_0 = arith.constant 0 : i32
    %c0_i32_1 = arith.constant 0 : i32
    return %c0_i32, %c0_i32_0 : i32, i32
  }
  func.func @transform_1(%arg0: i32) -> (i32, i32) {
    %c0_i32 = arith.constant 0 : i32
    %c0_i32_0 = arith.constant 0 : i32
    %c0_i32_1 = arith.constant 0 : i32
    return %c0_i32, %c0_i32_0 : i32, i32
  }
  func.func @transform_2(%arg0: i32) -> (i32, i32) {
    %c0_i32 = arith.constant 0 : i32
    %c0_i32_0 = arith.constant 0 : i32
    %c0_i32_1 = arith.constant 0 : i32
    return %c0_i32, %c0_i32_0 : i32, i32
  }
  func.func @transform_3(%arg0: i32) -> (i32, i32) {
    %c0_i32 = arith.constant 0 : i32
    %c0_i32_0 = arith.constant 0 : i32
    %c0_i32_1 = arith.constant 0 : i32
    return %c0_i32, %c0_i32_0 : i32, i32
  }
  func.func @transform_4(%arg0: i32) -> (i32, i32) {
    %c0_i32 = arith.constant 0 : i32
    %c0_i32_0 = arith.constant 0 : i32
    %c0_i32_1 = arith.constant 0 : i32
    return %c0_i32, %c0_i32_0 : i32, i32
  }
  func.func @transform_5(%arg0: i32) -> (i32, i32) {
    %c0_i32 = arith.constant 0 : i32
    %c0_i32_0 = arith.constant 0 : i32
    %c0_i32_1 = arith.constant 0 : i32
    return %c0_i32, %c0_i32_0 : i32, i32
  }
  func.func @transform_6(%arg0: i32) -> (i32, i32) {
    %c0_i32 = arith.constant 0 : i32
    %c0_i32_0 = arith.constant 0 : i32
    %c0_i32_1 = arith.constant 0 : i32
    return %c0_i32, %c0_i32_0 : i32, i32
  }
  func.func @transform_7(%arg0: i32) -> (i32, i32) {
    %c0_i32 = arith.constant 0 : i32
    %c0_i32_0 = arith.constant 0 : i32
    %c0_i32_1 = arith.constant 0 : i32
    return %c0_i32, %c0_i32_0 : i32, i32
  }
  func.func @transform_8(%arg0: i32) -> (i32, i32) {
    %c0_i32 = arith.constant 0 : i32
    %c0_i32_0 = arith.constant 0 : i32
    %c0_i32_1 = arith.constant 0 : i32
    return %c0_i32, %c0_i32_0 : i32, i32
  }
  func.func @transform_9(%arg0: i32) -> (i32, i32) {
    %c0_i32 = arith.constant 0 : i32
    %c0_i32_0 = arith.constant 0 : i32
    %c0_i32_1 = arith.constant 0 : i32
    return %c0_i32, %c0_i32_0 : i32, i32
  }
  func.func @transform_10(%arg0: i32) -> (i32, i32) {
    %c0_i32 = arith.constant 0 : i32
    %c0_i32_0 = arith.constant 0 : i32
    %c0_i32_1 = arith.constant 0 : i32
    return %c0_i32, %c0_i32_0 : i32, i32
  }
  func.func @transform_11(%arg0: i32) -> (i32, i32) {
    %c0_i32 = arith.constant 0 : i32
    %c0_i32_0 = arith.constant 0 : i32
    %c0_i32_1 = arith.constant 0 : i32
    return %c0_i32, %c0_i32_0 : i32, i32
  }
  func.func @transform_12(%arg0: i32) -> (i32, i32) {
    %c0_i32 = arith.constant 0 : i32
    %c0_i32_0 = arith.constant 0 : i32
    %c0_i32_1 = arith.constant 0 : i32
    return %c0_i32, %c0_i32_0 : i32, i32
  }
}

</mosaic_0001>

<llo_original>
// kernel: tpu_custom_call.1
$region0: #{tpu_custom_call.1}
  #allocation0 [shape = 'u32[]', space=smem, size = 0x4, offset = 0x4, fixed_abs, tag = 'smem constant byte address 0x4 - core index']
  #allocation1 [shape = 'u32[72,128]{1,0:T(1,128)}', space=vmem, size = 0x9000, scoped, tag = 'internal scratch']
  %s0 = inlined_call_operand.hbm [shape: bf16[16,16], index: 0, kind: input, shape index: {}]
  %s1 = inlined_call_operand.vmem [shape: f32[16,8], index: 1, kind: input, shape index: {}]
  %s2 = inlined_call_operand.hbm [shape: f32[8,32], index: 2, kind: input, shape index: {}]
  %s3 = inlined_call_operand.vmem [shape: f32[1,32], index: 3, kind: input, shape index: {}]
  %s4 = inlined_call_operand.hbm [shape: f32[32,32], index: 4, kind: input, shape index: {}]
  %s5 = inlined_call_operand.hbm [shape: f32[1,32], index: 5, kind: input, shape index: {}]
  %s6 = inlined_call_operand.hbm [shape: f32[1,32], index: 6, kind: input, shape index: {}]
  %s7 = inlined_call_operand.hbm [shape: f32[1,32], index: 7, kind: input, shape index: {}]
  %s8 = inlined_call_operand.hbm [shape: f32[32,32], index: 8, kind: input, shape index: {}]
  %s9 = inlined_call_operand.hbm [shape: f32[1,32], index: 9, kind: input, shape index: {}]
  %s10 = inlined_call_operand.vmem [shape: f32[32,128], index: 10, kind: input, shape index: {}]
  %s11 = inlined_call_operand.vmem [shape: f32[1,128], index: 11, kind: input, shape index: {}]
  %s12 = inlined_call_operand.hbm [shape: f32[16,128], index: 12, kind: output, shape index: {}]
  %s13 = sld [smem:[#allocation0]]
  $region90: #{tpu_custom_call.1} parent=0
    _
  %s15 = ssub.s32 1, %s13
  %s16 = scalar_select 0, %s15, %s13
  $region1: #{tpu_custom_call.1} parent=0
    #allocation2 [shape = 'u8[4096]{0}', space=vmem, size = 0x1000, scoped, tag = 'input window, operand 0, single buffered']
    #allocation3 [shape = 's32[1]{0}', space=sflag, size = 0x4, scoped, tag = 'scoped memory for tpu_custom_call.1']
    #allocation4 [shape = 's32[1]{0}', space=sflag, size = 0x4, scoped, tag = 'scoped memory for tpu_custom_call.1']
    #allocation5 [shape = 'u8[4096]{0}', space=vmem, size = 0x1000, scoped, tag = 'input window, operand 2, single buffered']
    #allocation6 [shape = 's32[1]{0}', space=sflag, size = 0x4, scoped, tag = 'scoped memory for tpu_custom_call.1']
    #allocation7 [shape = 'u8[16384]{0}', space=vmem, size = 0x4000, scoped, tag = 'input window, operand 4, single buffered']
    #allocation8 [shape = 'u8[512]{0}', space=vmem, size = 0x400, scoped, tag = 'input window, operand 5, single buffered']
    #allocation9 [shape = 's32[1]{0}', space=sflag, size = 0x4, scoped, tag = 'scoped memory for tpu_custom_call.1']
    #allocation10 [shape = 'u8[512]{0}', space=vmem, size = 0x400, scoped, tag = 'input window, operand 6, single buffered']
    #allocation11 [shape = 'u8[512]{0}', space=vmem, size = 0x400, scoped, tag = 'input window, operand 7, single buffered']
    #allocation12 [shape = 's32[1]{0}', space=sflag, size = 0x4, scoped, tag = 'scoped memory for tpu_custom_call.1']
    #allocation13 [shape = 'u8[16384]{0}', space=vmem, size = 0x4000, scoped, tag = 'input window, operand 8, single buffered']
    #allocation14 [shape = 'u8[512]{0}', space=vmem, size = 0x400, scoped, tag = 'input window, operand 9, single buffered']
    #allocation15 [shape = 's32[1]{0}', space=sflag, size = 0x4, scoped, tag = 'scoped memory for tpu_custom_call.1']
    #allocation16 [shape = 'u8[8192]{0}', space=vmem, size = 0x2000, scoped, tag = 'output window, operand 0, single buffered']
    %17 = vsyncpa [#allocation3], 0
    %18 = vsyncpa [#allocation6], 0
    %19 = vsyncpa [#allocation9], 0
    %20 = vsyncpa [#allocation12], 0
    %21 = vsyncpa [#allocation15], 0
    %22 = vsyncpa [#allocation4], 0
    // Predicated region
    $region2: #{tpu_custom_call.1} parent=1 // pred_check
      _
    $region3: #{tpu_custom_call.1} parent=1 // pred_check_branch
      %24 = sbr.rel (0) target = $region5
    $region4: #{tpu_custom_call.1} parent=1 // pred_region
      %26 = vsyncadd [#allocation3], 0
      %s27 = sshll.u32 %s0, 4
      %s28 = int_to_ptr.hbm [resolvable:$true] %s27
      %s29 = sshll.u32 [#allocation2], 4
      %s30 = int_to_ptr.vmem [resolvable:$true] %s29
      %35 = dma.hbm_to_vmem [thread:$0]  %s28, 128, %s30, [#allocation3], 64, 64, 4
    $region5: #{tpu_custom_call.1} parent=1 // pred_fallthru
      _
    // Predicated region
    $region6: #{tpu_custom_call.1} parent=1 // pred_check
      _
    $region7: #{tpu_custom_call.1} parent=1 // pred_check_branch
      %37 = sbr.rel (0) target = $region9
    $region8: #{tpu_custom_call.1} parent=1 // pred_region
      _
    $region9: #{tpu_custom_call.1} parent=1 // pred_fallthru
      _
    // Predicated region
    $region10: #{tpu_custom_call.1} parent=1 // pred_check
      _
    $region11: #{tpu_custom_call.1} parent=1 // pred_check_branch
      %39 = sbr.rel (0) target = $region13
    $region12: #{tpu_custom_call.1} parent=1 // pred_region
      %41 = vsyncadd [#allocation6], 0
      %s43 = sshll.u32 %s2, 4
      %s44 = int_to_ptr.hbm [resolvable:$true] %s43
      %s45 = sshll.u32 [#allocation5], 4
      %s46 = int_to_ptr.vmem [resolvable:$true] %s45
      %48 = dma.hbm_to_vmem [thread:$0]  %s44, 128, %s46, [#allocation6]
    $region13: #{tpu_custom_call.1} parent=1 // pred_fallthru
      _
    // Predicated region
    $region14: #{tpu_custom_call.1} parent=1 // pred_check
      _
    $region15: #{tpu_custom_call.1} parent=1 // pred_check_branch
      %50 = sbr.rel (0) target = $region17
    $region16: #{tpu_custom_call.1} parent=1 // pred_region
      _
    $region17: #{tpu_custom_call.1} parent=1 // pred_fallthru
      _
    // Predicated region
    $region18: #{tpu_custom_call.1} parent=1 // pred_check
      _
    $region19: #{tpu_custom_call.1} parent=1 // pred_check_branch
      %52 = sbr.rel (0) target = $region21
    $region20: #{tpu_custom_call.1} parent=1 // pred_region
      %54 = vsyncadd [#allocation6], 0
      %s55 = sshll.u32 %s4, 4
      %s56 = int_to_ptr.hbm [resolvable:$true] %s55
      %s57 = sshll.u32 [#allocation7], 4
      %s58 = int_to_ptr.vmem [resolvable:$true] %s57
      %63 = dma.hbm_to_vmem [thread:$0]  %s56, 512, %s58, [#allocation6], 128, 128, 8
    $region21: #{tpu_custom_call.1} parent=1 // pred_fallthru
      _
    // Predicated region
    $region22: #{tpu_custom_call.1} parent=1 // pred_check
      _
    $region23: #{tpu_custom_call.1} parent=1 // pred_check_branch
      %65 = sbr.rel (0) target = $region25
    $region24: #{tpu_custom_call.1} parent=1 // pred_region
      %67 = vsyncadd [#allocation9], 0
      %s69 = sshll.u32 %s5, 4
      %s70 = int_to_ptr.hbm [resolvable:$true] %s69
      %s71 = sshll.u32 [#allocation8], 4
      %s72 = int_to_ptr.vmem [resolvable:$true] %s71
      %74 = dma.hbm_to_vmem [thread:$0]  %s70, 16, %s72, [#allocation9]
    $region25: #{tpu_custom_call.1} parent=1 // pred_fallthru
      _
    // Predicated region
    $region26: #{tpu_custom_call.1} parent=1 // pred_check
      _
    $region27: #{tpu_custom_call.1} parent=1 // pred_check_branch
      %76 = sbr.rel (0) target = $region29
    $region28: #{tpu_custom_call.1} parent=1 // pred_region
      %78 = vsyncadd [#allocation9], 0
      %s80 = sshll.u32 %s6, 4
      %s81 = int_to_ptr.hbm [resolvable:$true] %s80
      %s82 = sshll.u32 [#allocation10], 4
      %s83 = int_to_ptr.vmem [resolvable:$true] %s82
      %85 = dma.hbm_to_vmem [thread:$0]  %s81, 16, %s83, [#allocation9]
    $region29: #{tpu_custom_call.1} parent=1 // pred_fallthru
      _
    // Predicated region
    $region30: #{tpu_custom_call.1} parent=1 // pred_check
      _
    $region31: #{tpu_custom_call.1} parent=1 // pred_check_branch
      %87 = sbr.rel (0) target = $region33
    $region32: #{tpu_custom_call.1} parent=1 // pred_region
      %89 = vsyncadd [#allocation12], 0
      %s91 = sshll.u32 %s7, 4
      %s92 = int_to_ptr.hbm [resolvable:$true] %s91
      %s93 = sshll.u32 [#allocation11], 4
      %s94 = int_to_ptr.vmem [resolvable:$true] %s93
      %96 = dma.hbm_to_vmem [thread:$0]  %s92, 16, %s94, [#allocation12]
    $region33: #{tpu_custom_call.1} parent=1 // pred_fallthru
      _
    // Predicated region
    $region34: #{tpu_custom_call.1} parent=1 // pred_check
      _
    $region35: #{tpu_custom_call.1} parent=1 // pred_check_branch
      %98 = sbr.rel (0) target = $region37
    $region36: #{tpu_custom_call.1} parent=1 // pred_region
      %100 = vsyncadd [#allocation12], 0
      %s101 = sshll.u32 %s8, 4
      %s102 = int_to_ptr.hbm [resolvable:$true] %s101
      %s103 = sshll.u32 [#allocation13], 4
      %s104 = int_to_ptr.vmem [resolvable:$true] %s103
      %109 = dma.hbm_to_vmem [thread:$0]  %s102, 512, %s104, [#allocation12], 128, 128, 8
    $region37: #{tpu_custom_call.1} parent=1 // pred_fallthru
      _
    // Predicated region
    $region38: #{tpu_custom_call.1} parent=1 // pred_check
      _
    $region39: #{tpu_custom_call.1} parent=1 // pred_check_branch
      %111 = sbr.rel (0) target = $region41
    $region40: #{tpu_custom_call.1} parent=1 // pred_region
      %113 = vsyncadd [#allocation15], 0
      %s115 = sshll.u32 %s9, 4
      %s116 = int_to_ptr.hbm [resolvable:$true] %s115
      %s117 = sshll.u32 [#allocation14], 4
      %s118 = int_to_ptr.vmem [resolvable:$true] %s117
      %120 = dma.hbm_to_vmem [thread:$0]  %s116, 16, %s118, [#allocation15]
    $region41: #{tpu_custom_call.1} parent=1 // pred_fallthru
      _
    // Predicated region
    $region42: #{tpu_custom_call.1} parent=1 // pred_check
      _
    $region43: #{tpu_custom_call.1} parent=1 // pred_check_branch
      %122 = sbr.rel (0) target = $region45
    $region44: #{tpu_custom_call.1} parent=1 // pred_region
      _
    $region45: #{tpu_custom_call.1} parent=1 // pred_fallthru
      _
    // Predicated region
    $region46: #{tpu_custom_call.1} parent=1 // pred_check
      _
    $region47: #{tpu_custom_call.1} parent=1 // pred_check_branch
      %124 = sbr.rel (0) target = $region49
    $region48: #{tpu_custom_call.1} parent=1 // pred_region
      _
    $region49: #{tpu_custom_call.1} parent=1 // pred_fallthru
      _
    // Predicated region
    $region50: #{tpu_custom_call.1} parent=1 // pred_check
      _
    $region51: #{tpu_custom_call.1} parent=1 // pred_check_branch
      %126 = sbr.rel (0) target = $region53
    $region52: #{tpu_custom_call.1} parent=1 // pred_region
      %128 = dma.done [#allocation3], 128
    $region53: #{tpu_custom_call.1} parent=1 // pred_fallthru
      _
    // Predicated region
    $region54: #{tpu_custom_call.1} parent=1 // pred_check
      _
    $region55: #{tpu_custom_call.1} parent=1 // pred_check_branch
      %130 = sbr.rel (0) target = $region57
    $region56: #{tpu_custom_call.1} parent=1 // pred_region
      %132 = dma.done [#allocation6], 128
    $region57: #{tpu_custom_call.1} parent=1 // pred_fallthru
      _
    // Predicated region
    $region58: #{tpu_custom_call.1} parent=1 // pred_check
      _
    $region59: #{tpu_custom_call.1} parent=1 // pred_check_branch
      %134 = sbr.rel (0) target = $region61
    $region60: #{tpu_custom_call.1} parent=1 // pred_region
      %136 = dma.done [#allocation6], 512
    $region61: #{tpu_custom_call.1} parent=1 // pred_fallthru
      _
    // Predicated region
    $region62: #{tpu_custom_call.1} parent=1 // pred_check
      _
    $region63: #{tpu_custom_call.1} parent=1 // pred_check_branch
      %138 = sbr.rel (0) target = $region65
    $region64: #{tpu_custom_call.1} parent=1 // pred_region
      %140 = dma.done [#allocation9], 16
    $region65: #{tpu_custom_call.1} parent=1 // pred_fallthru
      _
    // Predicated region
    $region66: #{tpu_custom_call.1} parent=1 // pred_check
      _
    $region67: #{tpu_custom_call.1} parent=1 // pred_check_branch
      %142 = sbr.rel (0) target = $region69
    $region68: #{tpu_custom_call.1} parent=1 // pred_region
      %144 = dma.done [#allocation9], 16
    $region69: #{tpu_custom_call.1} parent=1 // pred_fallthru
      _
    // Predicated region
    $region70: #{tpu_custom_call.1} parent=1 // pred_check
      _
    $region71: #{tpu_custom_call.1} parent=1 // pred_check_branch
      %146 = sbr.rel (0) target = $region73
    $region72: #{tpu_custom_call.1} parent=1 // pred_region
      %148 = dma.done [#allocation12], 16
    $region73: #{tpu_custom_call.1} parent=1 // pred_fallthru
      _
    // Predicated region
    $region74: #{tpu_custom_call.1} parent=1 // pred_check
      _
    $region75: #{tpu_custom_call.1} parent=1 // pred_check_branch
      %150 = sbr.rel (0) target = $region77
    $region76: #{tpu_custom_call.1} parent=1 // pred_region
      %152 = dma.done [#allocation12], 512
    $region77: #{tpu_custom_call.1} parent=1 // pred_fallthru
      _
    // Predicated region
    $region78: #{tpu_custom_call.1} parent=1 // pred_check
      _
    $region79: #{tpu_custom_call.1} parent=1 // pred_check_branch
      %154 = sbr.rel (0) target = $region81
    $region80: #{tpu_custom_call.1} parent=1 // pred_region
      %156 = dma.done [#allocation15], 16
    $region81: #{tpu_custom_call.1} parent=1 // pred_fallthru
      _
    %v158 = vld [vmem:[#allocation2] sm:$0xf]
    %v159 = vld [vmem:[#allocation2 + $0x4] sm:$0xf]
    %v160 = vld [vmem:[%s1] sm:$0xff]
    %v161 = vld [vmem:[%s1 + $0x8] sm:$0xff]
    %v162 = vpack.c.bf16 %v161, %v160
    %v165 = vunpack.c.l.b16 %v158
    %v166 = vunpack.c.l.b16 %v159
    %v167 = vpack.c.b16 %v166, %v165
    %vm168 = vcmask 130048
    %v170 = vsel %vm168, %v167, 0
    %172 = vmatpush.bf16.msra.mxu0 0
    %173 = vmatpush.bf16.msra.mxu0 0
    %174 = vmatpush.bf16.msra.mxu0 0
    %175 = vmatpush.bf16.msra.mxu0 0
    %176 = vmatpush.bf16.msra.mxu0 0
    %177 = vmatpush.bf16.msra.mxu0 0
    %178 = vmatpush.bf16.msra.mxu0 0
    %179 = vmatpush.bf16.msra.mxu0 %v162
    %180 = vmatmul.bf16.gmra.mxu0 %v170
    %v181 = vpop.f32.mrf.mxu0
    %v182 = vadd.f32 %v160, %v181
    %v183 = vpop.f32.mrf.mxu0
    %v184 = vadd.f32 %v161, %v183
    %185 = vdwg.mxu0
    %v186 = vld [vmem:[#allocation5] sm:$0xff]
    %v187 = vld [vmem:[%s3] sm:$0x1]
    %v189 = vperm.slane %v187, 0
    %vm191 = vcmask 64512
    %v193 = vsel %vm191, %v182, 0
    %v196 = vsel %vm191, %v184, 0
    %198 = vmatpush.msra.mxu0 0.0
    %199 = vmatpush.msra.mxu0 0.0
    %200 = vmatpush.msra.mxu0 0.0
    %201 = vmatpush.msra.mxu0 0.0
    %202 = vmatpush.msra.mxu0 0.0
    %203 = vmatpush.msra.mxu0 0.0
    %204 = vmatpush.msra.mxu0 0.0
    %205 = vmatpush.msra.mxu0 0.0
    %206 = vmatpush.msra.mxu0 0.0
    %207 = vmatpush.msra.mxu0 0.0
    %208 = vmatpush.msra.mxu0 0.0
    %209 = vmatpush.msra.mxu0 0.0
    %210 = vmatpush.msra.mxu0 0.0
    %211 = vmatpush.msra.mxu0 0.0
    %212 = vmatpush.msra.mxu0 0.0
    %213 = vmatpush.msra.mxu0 %v186
    %214 = vmatmul.f32.gmra.mxu0 %v193
    %v215 = vpop.f32.mrf.mxu0
    %v216 = vadd.f32 %v189, %v215
    %217 = vmatmul.f32.gmra.mxu0 %v196
    %v218 = vpop.f32.mrf.mxu0
    %v219 = vadd.f32 %v189, %v218
    %220 = vdwg.mxu0
    %v221 = vmax.f32 %v216, 0.0
    %v222 = vmax.f32 %v219, 0.0
    %v223 = vld [vmem:[#allocation7] sm:$0xff]
    %v224 = vld [vmem:[#allocation7 + $0x8] sm:$0xff]
    %v225 = vld [vmem:[#allocation7 + $0x10] sm:$0xff]
    %v226 = vld [vmem:[#allocation7 + $0x18] sm:$0xff]
    %v227 = vld [vmem:[#allocation8] sm:$0x1]
    %v229 = vperm.slane %v227, 0
    %vm231 = vcmask 261120
    %v233 = vsel %vm231, %v221, 0
    %v236 = vsel %vm231, %v222, 0
    %238 = vmatpush.msra.mxu0 0.0
    %239 = vmatpush.msra.mxu0 0.0
    %240 = vmatpush.msra.mxu0 0.0
    %241 = vmatpush.msra.mxu0 0.0
    %242 = vmatpush.msra.mxu0 0.0
    %243 = vmatpush.msra.mxu0 0.0
    %244 = vmatpush.msra.mxu0 0.0
    %245 = vmatpush.msra.mxu0 0.0
    %246 = vmatpush.msra.mxu0 0.0
    %247 = vmatpush.msra.mxu0 0.0
    %248 = vmatpush.msra.mxu0 0.0
    %249 = vmatpush.msra.mxu0 0.0
    %250 = vmatpush.msra.mxu0 %v226
    %251 = vmatpush.msra.mxu0 %v225
    %252 = vmatpush.msra.mxu0 %v224
    %253 = vmatpush.msra.mxu0 %v223
    %254 = vmatmul.f32.gmra.mxu0 %v233
    %v255 = vpop.f32.mrf.mxu0
    %v256 = vadd.f32 %v229, %v255
    %257 = vmatmul.f32.gmra.mxu0 %v236
    %v258 = vpop.f32.mrf.mxu0
    %v259 = vadd.f32 %v229, %v258
    %260 = vdwg.mxu0
    %v261 = vmax.f32 %v256, 0.0
    %v262 = vmax.f32 %v259, 0.0
    %v263 = vsel %vm231, %v261, 0.0
    %v264 = vsel %vm231, %v262, 0.0
    %v265 = vadd.f32 %v263, %v264
    %v266 = vrot.slane %v265, 4
    %v267 = vadd.f32 %v265, %v266
    %v268 = vrot.slane %v267, 2
    %v269 = vadd.f32 %v267, %v268
    %v270 = vrot.slane %v269, 1
    %v271 = vadd.f32 %v269, %v270
    %v272 = vmul.f32 %v271, 0.0625
    %v273 = vmul.f32 %v261, %v261
    %v274 = vmul.f32 %v262, %v262
    %v275 = vsel %vm231, %v273, 0.0
    %v276 = vsel %vm231, %v274, 0.0
    %v277 = vadd.f32 %v275, %v276
    %v278 = vrot.slane %v277, 4
    %v279 = vadd.f32 %v277, %v278
    %v280 = vrot.slane %v279, 2
    %v281 = vadd.f32 %v279, %v280
    %v282 = vrot.slane %v281, 1
    %v283 = vadd.f32 %v281, %v282
    %v284 = vmul.f32 %v283, 0.0625
    %v285 = vmul.f32 %v272, %v272
    %v286 = vsub.f32 %v284, %v285
    %v287 = vld [vmem:[#allocation10] sm:$0x1]
    %v288 = vadd.f32 %v286, 1e-05
    %v289 = vrsqrt.pop %v288
    %v290 = vmul.f32 %v289, %v288
    %v291 = vmul.f32 %v290, %v289
    %v292 = vmul.f32 0.5, %v291
    %v293 = vsub.f32 1.5, %v292
    %v294 = vmul.f32 %v289, %v293
    %vm295 = vweird.f32 %v288
    %vm296 = vweird.f32 %v289
    %vm297 = vmor %vm295, %vm296
    %v298 = vsel %vm297, %v289, %v294
    %v299 = vmul.f32 %v287, %v298
    %v300 = vld [vmem:[#allocation11] sm:$0x1]
    %v301 = vmul.f32 %v272, %v299
    %v302 = vsub.f32 %v300, %v301
    %v304 = vperm.slane %v299, 0
    %v306 = vmul.f32 %v261, %v304
    %v307 = vmul.f32 %v262, %v304
    %v309 = vperm.slane %v302, 0
    %v311 = vadd.f32 %v306, %v309
    %v312 = vadd.f32 %v307, %v309
    %v313 = vpack.c.bf16 %v312, %v311
    %314 = vmatpush.bf16.msra.mxu0 0
    %315 = vmatpush.bf16.msra.mxu0 0
    %316 = vmatpush.bf16.msra.mxu0 0
    %317 = vmatpush.bf16.msra.mxu0 0
    %318 = vmatpush.bf16.msra.mxu0 0
    %319 = vmatpush.bf16.msra.mxu0 0
    %320 = vmatpush.bf16.msra.mxu0 0
    %321 = vmatpush.bf16.msra.mxu0 %v313
    %322 = vmatmul.bf16.gmra.mxu0 %v170
    %v323 = vpop.f32.mrf.mxu0
    %v324 = vadd.f32 %v311, %v323
    %v325 = vpop.f32.mrf.mxu0
    %v326 = vadd.f32 %v312, %v325
    %327 = vdwg.mxu0
    %v328 = vld [vmem:[#allocation13] sm:$0xff]
    %v329 = vld [vmem:[#allocation13 + $0x8] sm:$0xff]
    %v330 = vld [vmem:[#allocation13 + $0x10] sm:$0xff]
    %v331 = vld [vmem:[#allocation13 + $0x18] sm:$0xff]
    %v332 = vld [vmem:[#allocation14] sm:$0x1]
    %v334 = vperm.slane %v332, 0
    %v337 = vsel %vm231, %v324, 0
    %v340 = vsel %vm231, %v326, 0
    %342 = vmatpush.msra.mxu0 0.0
    %343 = vmatpush.msra.mxu0 0.0
    %344 = vmatpush.msra.mxu0 0.0
    %345 = vmatpush.msra.mxu0 0.0
    %346 = vmatpush.msra.mxu0 0.0
    %347 = vmatpush.msra.mxu0 0.0
    %348 = vmatpush.msra.mxu0 0.0
    %349 = vmatpush.msra.mxu0 0.0
    %350 = vmatpush.msra.mxu0 0.0
    %351 = vmatpush.msra.mxu0 0.0
    %352 = vmatpush.msra.mxu0 0.0
    %353 = vmatpush.msra.mxu0 0.0
    %354 = vmatpush.msra.mxu0 %v331
    %355 = vmatpush.msra.mxu0 %v330
    %356 = vmatpush.msra.mxu0 %v329
    %357 = vmatpush.msra.mxu0 %v328
    %358 = vmatmul.f32.gmra.mxu0 %v337
    %v359 = vpop.f32.mrf.mxu0
    %v360 = vadd.f32 %v334, %v359
    %361 = vmatmul.f32.gmra.mxu0 %v340
    %v362 = vpop.f32.mrf.mxu0
    %v363 = vadd.f32 %v334, %v362
    %364 = vdwg.mxu0
    %v365 = vmax.f32 %v360, 0.0
    %v366 = vmax.f32 %v363, 0.0
    %v367 = vld [vmem:[%s10] sm:$0xff]
    %v368 = vld [vmem:[%s10 + $0x8] sm:$0xff]
    %v369 = vld [vmem:[%s10 + $0x10] sm:$0xff]
    %v370 = vld [vmem:[%s10 + $0x18] sm:$0xff]
    %v371 = vld [vmem:[%s11] sm:$0x1]
    %v373 = vperm.slane %v371, 0
    %v376 = vsel %vm231, %v365, 0
    %v379 = vsel %vm231, %v366, 0
    %381 = vmatpush.msra.mxu0 0.0
    %382 = vmatpush.msra.mxu0 0.0
    %383 = vmatpush.msra.mxu0 0.0
    %384 = vmatpush.msra.mxu0 0.0
    %385 = vmatpush.msra.mxu0 0.0
    %386 = vmatpush.msra.mxu0 0.0
    %387 = vmatpush.msra.mxu0 0.0
    %388 = vmatpush.msra.mxu0 0.0
    %389 = vmatpush.msra.mxu0 0.0
    %390 = vmatpush.msra.mxu0 0.0
    %391 = vmatpush.msra.mxu0 0.0
    %392 = vmatpush.msra.mxu0 0.0
    %393 = vmatpush.msra.mxu0 %v370
    %394 = vmatpush.msra.mxu0 %v369
    %395 = vmatpush.msra.mxu0 %v368
    %396 = vmatpush.msra.mxu0 %v367
    %397 = vmatmul.f32.gmra.mxu0 %v376
    %v398 = vpop.f32.mrf.mxu0
    %v399 = vadd.f32 %v373, %v398
    %400 = vmatmul.f32.gmra.mxu0 %v379
    %v401 = vpop.f32.mrf.mxu0
    %v402 = vadd.f32 %v373, %v401
    %403 = vdwg.mxu0
    %404 = vst [vmem:[#allocation16] sm:$0xff] %v399
    %405 = vst [vmem:[#allocation16 + $0x8] sm:$0xff] %v402
    // Predicated region
    $region82: #{tpu_custom_call.1} parent=1 // pred_check
      _
    $region83: #{tpu_custom_call.1} parent=1 // pred_check_branch
      %407 = sbr.rel (0) target = $region85
    $region84: #{tpu_custom_call.1} parent=1 // pred_region
      %409 = vsyncadd [#allocation4], 0
      %s410 = sshll.u32 [#allocation16], 4
      %s411 = int_to_ptr.vmem [resolvable:$true] %s410
      %s412 = sshll.u32 %s12, 4
      %s413 = int_to_ptr.hbm [resolvable:$true] %s412
      %418 = dma.vmem_to_hbm [thread:$0]  %s411, 256, %s413, [#allocation4], 128, 128, 8
    $region85: #{tpu_custom_call.1} parent=1 // pred_fallthru
      _
    // Predicated region
    $region86: #{tpu_custom_call.1} parent=1 // pred_check
      _
    $region87: #{tpu_custom_call.1} parent=1 // pred_check_branch
      %420 = sbr.rel (0) target = $region89
    $region88: #{tpu_custom_call.1} parent=1 // pred_region
      %422 = dma.done [#allocation4], 256
    $region89: #{tpu_custom_call.1} parent=1 // pred_fallthru
      _
    %423 = vsyncpa [#allocation3], 1
    %424 = vsyncpa [#allocation6], 1
    %425 = vsyncpa [#allocation9], 1
    %426 = vsyncpa [#allocation12], 1
    %427 = vsyncpa [#allocation15], 1
    %428 = vsyncpa [#allocation4], 1

</llo_original>
